<compile_context>
chip_gen: v7x
topology: tpu7x:2x2x1
jax: 0.10.0
libtpu: 0.0.40
codegen_flags: <defaults>
</compile_context>

<pallas_src>
import functools

import jax
import jax.numpy as jnp
from jax.experimental import pallas as pl
from jax.experimental.pallas import tpu as pltpu

_LANE = 128
_VMEM_TILE_BUDGET = 40 * 1024 * 1024   # conservative: also fits v7x (64 MiB/TC)


def _round_up(x, m):
    return (x + m - 1) // m * m


def _finalize(agg, ndst, w, b, *, apply_relu, final_log_softmax, n_valid_cols,
              out_dtype):
    """Post-aggregation transform: (A@(norm*h)) @ W, dst norm, bias, act."""
    out = jnp.dot(agg, w, preferred_element_type=jnp.float32)
    out = out * ndst + b
    if apply_relu:
        out = jnp.maximum(out, 0.0)
    if final_log_softmax:
        # log_softmax over the class axis; mask the lane-padding columns.
        cols = jax.lax.broadcasted_iota(jnp.int32, out.shape, 1)
        valid = cols < n_valid_cols
        masked = jnp.where(valid, out, -jnp.inf)
        m = jnp.max(masked, axis=1, keepdims=True)
        z = jnp.where(valid, jnp.exp(out - m), 0.0)
        lse = m + jnp.log(jnp.sum(z, axis=1, keepdims=True))
        out = out - lse            # padded columns are sliced off outside
    return out.astype(out_dtype)


def _gcn_layer_resident_kernel(a_ref, hn_ref, ndst_ref, w_ref, b_ref, o_ref, *,
                               apply_relu, final_log_softmax, n_valid_cols):
    # A row-supertile (tile_m, N) int8 -> bf16; hn fully VMEM-resident (bf16).
    agg = jnp.dot(a_ref[...].astype(jnp.bfloat16), hn_ref[...],
                  preferred_element_type=jnp.float32)
    o_ref[...] = _finalize(agg, ndst_ref[...], w_ref[...], b_ref[...],
                           apply_relu=apply_relu,
                           final_log_softmax=final_log_softmax,
                           n_valid_cols=n_valid_cols, out_dtype=o_ref.dtype)


def _gcn_layer_tiled_kernel(a_ref, hn_ref, ndst_ref, w_ref, b_ref, o_ref,
                            acc_ref, *, apply_relu, final_log_softmax,
                            n_valid_cols):
    k = pl.program_id(1)

    @pl.when(k == 0)
    def _():
        acc_ref[...] = jnp.zeros_like(acc_ref)

    # acc[i, :] += sum_j A[i, j] * (norm[j] * h[j, :])   (bf16 MXU, f32 acc)
    acc_ref[...] += jnp.dot(a_ref[...].astype(jnp.bfloat16), hn_ref[...],
                            preferred_element_type=jnp.float32)

    @pl.when(k == pl.num_programs(1) - 1)
    def _():
        o_ref[...] = _finalize(acc_ref[...], ndst_ref[...], w_ref[...],
                               b_ref[...], apply_relu=apply_relu,
                               final_log_softmax=final_log_softmax,
                               n_valid_cols=n_valid_cols,
                               out_dtype=o_ref.dtype)


def _choose_tiles(n_pad, fin_p, fout_p):
    """Pick (tile_m, tile_k) under a VMEM budget valid on every generation."""
    def footprint(tm, tk):
        a = 2 * tm * tk                        # int8 A tile, double-buffered
        feats = 2 * tk * fin_p * 2             # bf16 pre-scaled features
        acc = tm * fin_p * 4                   # accumulator / agg temp
        outs = 2 * tm * fout_p * 4             # f32 output tile
        params = 2 * (fin_p * fout_p * 4 + fout_p * 4 + tm * 4)
        return a + feats + acc + outs + params

    tm_opts = [t for t in (512, 256, 128) if n_pad % t == 0] or [n_pad]
    tk_opts = [n_pad] + [t for t in (4096, 2048, 1024, 512, 256)
                         if t < n_pad and n_pad % t == 0] + [128]
    for tk in tk_opts:
        for tm in tm_opts:
            # Prefer >=2 row tiles so the "parallel" axis can feed both v7x TCs.
            if n_pad // tm < 2 and tm != tm_opts[-1] and n_pad > tm_opts[-1]:
                continue
            if footprint(tm, tk) <= _VMEM_TILE_BUDGET:
                return tm, tk, footprint(tm, tk)
    tm, tk = tm_opts[-1], 128
    return tm, tk, footprint(tm, tk)


def _gcn_layer(adj_q, hn, norm_dst, w, b, *, apply_relu, final_log_softmax,
               n_valid_cols, force_tiled=False):
    n_pad = adj_q.shape[0]
    fin_p = hn.shape[1]
    fout_p = w.shape[1]
    tile_m, tile_k, footprint = _choose_tiles(n_pad, fin_p, fout_p)
    resident = (tile_k == n_pad) and not force_tiled
    vmem_limit = int(min(max(2 * footprint, 32 * 1024 * 1024),
                         56 * 1024 * 1024))

    n_row_tiles = n_pad // tile_m
    flops = 2 * n_pad * n_pad * fin_p + 2 * n_pad * fin_p * fout_p
    transcendentals = n_pad * fout_p if final_log_softmax else 0
    hn_passes = 1 if resident else n_row_tiles
    bytes_accessed = (n_pad * n_pad                      # int8 adjacency
                      + hn_passes * n_pad * fin_p * 2    # bf16 features
                      + n_pad * fout_p * 4               # f32 output
                      + n_pad * 4                        # dst norm
                      + fin_p * fout_p * 4 + fout_p * 4)

    opts = dict(apply_relu=apply_relu, final_log_softmax=final_log_softmax,
                n_valid_cols=n_valid_cols)

    if resident:
        kernel = functools.partial(_gcn_layer_resident_kernel, **opts)
        grid_spec = pltpu.PrefetchScalarGridSpec(
            num_scalar_prefetch=0,
            grid=(n_row_tiles,),
            in_specs=[
                pl.BlockSpec((tile_m, n_pad), lambda i: (i, 0)),   # A rows (i8)
                pl.BlockSpec((n_pad, fin_p), lambda i: (0, 0)),    # hn resident
                pl.BlockSpec((tile_m, 1), lambda i: (i, 0)),       # norm[dst]
                pl.BlockSpec((fin_p, fout_p), lambda i: (0, 0)),   # W resident
                pl.BlockSpec((1, fout_p), lambda i: (0, 0)),       # b resident
            ],
            out_specs=pl.BlockSpec((tile_m, fout_p), lambda i: (i, 0)),
        )
        dims = ("parallel",)
    else:
        kernel = functools.partial(_gcn_layer_tiled_kernel, **opts)
        grid_spec = pltpu.PrefetchScalarGridSpec(
            num_scalar_prefetch=0,
            grid=(n_row_tiles, n_pad // tile_k),
            in_specs=[
                pl.BlockSpec((tile_m, tile_k), lambda i, k: (i, k)),   # A (i8)
                pl.BlockSpec((tile_k, fin_p), lambda i, k: (k, 0)),    # hn tile
                pl.BlockSpec((tile_m, 1), lambda i, k: (i, 0)),        # norm[dst]
                pl.BlockSpec((fin_p, fout_p), lambda i, k: (0, 0)),    # W
                pl.BlockSpec((1, fout_p), lambda i, k: (0, 0)),        # bias
            ],
            out_specs=pl.BlockSpec((tile_m, fout_p), lambda i, k: (i, 0)),
            scratch_shapes=[pltpu.VMEM((tile_m, fin_p), jnp.float32)],
        )
        dims = ("parallel", "arbitrary")

    return pl.pallas_call(
        kernel,
        out_shape=jax.ShapeDtypeStruct((n_pad, fout_p), jnp.float32),
        grid_spec=grid_spec,
        compiler_params=pltpu.CompilerParams(
            dimension_semantics=dims, vmem_limit_bytes=vmem_limit),
        cost_estimate=pl.CostEstimate(flops=flops,
                                      transcendentals=transcendentals,
                                      bytes_accessed=bytes_accessed),
    )(adj_q, hn, norm_dst, w, b)


@functools.partial(jax.jit, static_argnames=("n_classes", "force_tiled"))
def gcn_model_forward(adj, features, weights, biases, *, n_classes,
                      force_tiled=False):
    """GCN_model.forward: stacked GCNLayers (ReLU) + final layer + log_softmax.

    adj: (N, N) dense adjacency (A[dst, src] = 1).  features: (N, in_feats).
    weights/biases: per-layer parameter lists.
    Dropout is the identity in eval mode.
    """
    n = adj.shape[0]
    adj = adj.astype(jnp.float32)

    # g.ndata['norm'] = in_degree^-0.5 (0 for isolated nodes), DGL-style.
    deg = jnp.sum(adj, axis=1, keepdims=True)
    norm = jnp.where(deg > 0.0, jax.lax.rsqrt(jnp.maximum(deg, 1.0)), 0.0)

    n_pad = _round_up(n, _LANE)
    # Quantize (exact for 0/1) then pad; never materialize a padded f32 A.
    adj_q = jnp.pad(adj.astype(jnp.int8), ((0, n_pad - n), (0, n_pad - n)))
    norm_p = jnp.pad(norm, ((0, n_pad - n), (0, 0)))

    fin = features.shape[1]
    fin_p0 = _round_up(fin, _LANE)
    h = jnp.pad(features.astype(jnp.float32),
                ((0, n_pad - n), (0, fin_p0 - fin)))

    n_layers = len(weights)
    for li, (w, b) in enumerate(zip(weights, biases)):
        f_in, f_out = w.shape
        fin_p = h.shape[1]                    # already lane-padded
        fout_p = _round_up(f_out, _LANE)
        w_p = jnp.pad(w.astype(jnp.float32),
                      ((0, fin_p - f_in), (0, fout_p - f_out)))
        b_p = jnp.pad(b.astype(jnp.float32),
                      (0, fout_p - f_out)).reshape(1, fout_p)
        # Pre-scale by the src-side norm and cast to bf16 ONCE per layer
        # (amortized over all row tiles; halves feature HBM traffic and hands
        #  the MXU a ready bf16 operand).
        hn = (h * norm_p).astype(jnp.bfloat16)
        last = li == n_layers - 1
        h = _gcn_layer(adj_q, hn, norm_p, w_p, b_p,
                       apply_relu=not last, final_log_softmax=last,
                       n_valid_cols=f_out, force_tiled=force_tiled)
    return h[:n, :n_classes]


def _reference(adj, feat, weights, biases):
    """Pure-JAX reference following the PyTorch module's op order."""
    A = adj.astype(jnp.float32)
    deg = jnp.sum(A, axis=1, keepdims=True)
    norm = jnp.where(deg > 0.0, jnp.where(deg > 0.0, deg, 1.0) ** -0.5, 0.0)
    h = feat.astype(jnp.float32)
    n_layers = len(weights)
    for li, (w, b) in enumerate(zip(weights, biases)):
        h = jnp.dot(h, w) * norm          # transform, src-side norm
        h = jnp.dot(A, h)                 # copy_src + sum over in-edges
        h = h * norm + b                  # dst-side norm, bias
        if li < n_layers - 1:
            h = jnp.maximum(h, 0.0)       # activation = ReLU
    return jax.nn.log_softmax(h, axis=1)


if __name__ == "__main__":
    # GCN_model(in_feats=16, n_hidden=32, n_classes=8, n_hop=2,
    #           activation=relu, dropout=...) in eval mode.
    # TODO(synk): training-mode dropout is not implemented (identity in eval).
    N, IN_FEATS, N_HIDDEN, N_CLASSES, N_HOP = 128, 16, 32, 8, 2

    key = jax.random.PRNGKey(0)
    keys = jax.random.split(key, 2 + 2 * (N_HOP + 1))
    k_adj, k_feat = keys[0], keys[1]
    k_params = keys[2:]

    adj = jax.random.bernoulli(k_adj, 0.08, (N, N)).astype(jnp.float32)
    feat = jax.random.normal(k_feat, (N, IN_FEATS), dtype=jnp.float32)

    # Layers: in->hidden (relu), (n_hop-1) x hidden->hidden (relu),
    # hidden->classes (no activation). Init matches GCNLayer.reset_parameters.
    dims = [IN_FEATS] + [N_HIDDEN] * N_HOP + [N_CLASSES]
    weights, biases = [], []
    for i in range(len(dims) - 1):
        stdv = 1.0 / (dims[i + 1] ** 0.5)
        weights.append(jax.random.uniform(
            k_params[2 * i], (dims[i], dims[i + 1]),
            minval=-stdv, maxval=stdv, dtype=jnp.float32))
        biases.append(jax.random.uniform(
            k_params[2 * i + 1], (dims[i + 1],),
            minval=-stdv, maxval=stdv, dtype=jnp.float32))

    ref = _reference(adj, feat, weights, biases)

    # Resident (1-D grid) path — the one this graph size selects.
    out = gcn_model_forward(adj, feat, weights, biases, n_classes=N_CLASSES)
    out = jax.block_until_ready(out)
    assert out.shape == (N, N_CLASSES)
    assert bool(jnp.all(jnp.isfinite(out)))
    # bf16 aggregation operands + MXU default precision + the (exact) linear
    # reordering (aggregate-then-transform) -> loose tolerance vs XLA f32 ref.
    assert bool(jnp.allclose(out, ref, rtol=5e-2, atol=2e-2)), "mismatch (resident)"

    # Also exercise the k-tiled reduction path (degenerate 1x1 grid here).
    out_tiled = gcn_model_forward(adj, feat, weights, biases,
                                  n_classes=N_CLASSES, force_tiled=True)
    out_tiled = jax.block_until_ready(out_tiled)
    assert bool(jnp.allclose(out_tiled, ref, rtol=5e-2, atol=2e-2)), "mismatch (tiled)"

    print("KERNEL_OK")
</pallas_src>

<mosaic_0001>
module attributes {stable_mosaic.version = 11 : i64} {
  func.func @_gcn_layer_resident_kernel(%arg0: i32, %arg1: memref<128x128xi8, #tpu.memory_space<vmem>>, %arg2: memref<128x128xbf16, #tpu.memory_space<vmem>>, %arg3: memref<128x1xf32, #tpu.memory_space<vmem>>, %arg4: memref<128x128xf32, #tpu.memory_space<vmem>>, %arg5: memref<1x128xf32, #tpu.memory_space<vmem>>, %arg6: memref<128x128xf32, #tpu.memory_space<vmem>>) attributes {dimension_semantics = [#tpu.dimension_semantics<parallel>], iteration_bounds = array<i64: 1>, scalar_prefetch = 0 : i64, scratch_operands = 0 : i64, tpu.core_type = #tpu.core_type<tc>, window_params = [{transform_indices = @transform_0, window_bounds = array<i64: 128, 128>}, {pipeline_mode = #tpu.pipeline_mode<synchronous>, transform_indices = @transform_1, window_bounds = array<i64: 128, 128>}, {transform_indices = @transform_2, window_bounds = array<i64: 128, 1>}, {pipeline_mode = #tpu.pipeline_mode<synchronous>, transform_indices = @transform_3, window_bounds = array<i64: 128, 128>}, {pipeline_mode = #tpu.pipeline_mode<synchronous>, transform_indices = @transform_4, window_bounds = array<i64: 1, 128>}, {transform_indices = @transform_5, window_bounds = array<i64: 128, 128>}]} {
    %c0 = arith.constant 0 : index
    %c0_0 = arith.constant 0 : index
    %0 = vector.load %arg1[%c0, %c0_0] : memref<128x128xi8, #tpu.memory_space<vmem>>, vector<128x128xi8>
    %1 = arith.sitofp %0 : vector<128x128xi8> to vector<128x128xbf16>
    %c0_1 = arith.constant 0 : index
    %c0_2 = arith.constant 0 : index
    %2 = vector.load %arg2[%c0_1, %c0_2] : memref<128x128xbf16, #tpu.memory_space<vmem>>, vector<128x128xbf16>
    %cst = arith.constant dense<0.000000e+00> : vector<128x128xf32>
    %3 = tpu.matmul %1, %2, %cst {dimension_numbers = #tpu.dot_dimension_numbers<[1], [0], [0], [1], [0, 0, 1, 1], [], []>} : vector<128x128xbf16>, vector<128x128xbf16>, vector<128x128xf32> -> vector<128x128xf32>
    %c0_3 = arith.constant 0 : index
    %c0_4 = arith.constant 0 : index
    %4 = vector.load %arg3[%c0_3, %c0_4] : memref<128x1xf32, #tpu.memory_space<vmem>>, vector<128x1xf32>
    %c0_5 = arith.constant 0 : index
    %c0_6 = arith.constant 0 : index
    %5 = vector.load %arg4[%c0_5, %c0_6] : memref<128x128xf32, #tpu.memory_space<vmem>>, vector<128x128xf32>
    %c0_7 = arith.constant 0 : index
    %c0_8 = arith.constant 0 : index
    %6 = vector.load %arg5[%c0_7, %c0_8] : memref<1x128xf32, #tpu.memory_space<vmem>>, vector<1x128xf32>
    %cst_9 = arith.constant dense<0.000000e+00> : vector<128x128xf32>
    %7 = tpu.matmul %3, %5, %cst_9 {dimension_numbers = #tpu.dot_dimension_numbers<[1], [0], [0], [1], [0, 0, 1, 1], [], []>} : vector<128x128xf32>, vector<128x128xf32>, vector<128x128xf32> -> vector<128x128xf32>
    %8 = vector.broadcast %4 : vector<128x1xf32> to vector<128x128xf32>
    %9 = arith.mulf %7, %8 : vector<128x128xf32>
    %10 = vector.broadcast %6 : vector<1x128xf32> to vector<128x128xf32>
    %11 = arith.addf %9, %10 : vector<128x128xf32>
    %cst_10 = arith.constant 0.000000e+00 : f32
    %12 = vector.broadcast %cst_10 : f32 to vector<128x128xf32>
    %13 = arith.maximumf %11, %12 : vector<128x128xf32>
    %c0_11 = arith.constant 0 : index
    %c0_12 = arith.constant 0 : index
    %14 = vector.load %arg6[%c0_11, %c0_12] : memref<128x128xf32, #tpu.memory_space<vmem>>, vector<128x128xf32>
    tpu.vector_store %arg6[%c0_11, %c0_12], %13 {strides = array<i32>} : memref<128x128xf32, #tpu.memory_space<vmem>>, vector<128x128xf32>,
    return
  }
  func.func @transform_0(%arg0: i32) -> (i32, i32) {
    %c0_i32 = arith.constant 0 : i32
    %c0_i32_0 = arith.constant 0 : i32
    return %arg0, %c0_i32 : i32, i32
  }
  func.func @transform_1(%arg0: i32) -> (i32, i32) {
    %c0_i32 = arith.constant 0 : i32
    %c0_i32_0 = arith.constant 0 : i32
    %c0_i32_1 = arith.constant 0 : i32
    return %c0_i32, %c0_i32_0 : i32, i32
  }
  func.func @transform_2(%arg0: i32) -> (i32, i32) {
    %c0_i32 = arith.constant 0 : i32
    %c0_i32_0 = arith.constant 0 : i32
    return %arg0, %c0_i32 : i32, i32
  }
  func.func @transform_3(%arg0: i32) -> (i32, i32) {
    %c0_i32 = arith.constant 0 : i32
    %c0_i32_0 = arith.constant 0 : i32
    %c0_i32_1 = arith.constant 0 : i32
    return %c0_i32, %c0_i32_0 : i32, i32
  }
  func.func @transform_4(%arg0: i32) -> (i32, i32) {
    %c0_i32 = arith.constant 0 : i32
    %c0_i32_0 = arith.constant 0 : i32
    %c0_i32_1 = arith.constant 0 : i32
    return %c0_i32, %c0_i32_0 : i32, i32
  }
  func.func @transform_5(%arg0: i32) -> (i32, i32) {
    %c0_i32 = arith.constant 0 : i32
    %c0_i32_0 = arith.constant 0 : i32
    return %arg0, %c0_i32 : i32, i32
  }
}

module attributes {stable_mosaic.version = 11 : i64} {
  func.func @_gcn_layer_resident_kernel(%arg0: i32, %arg1: memref<128x128xi8, #tpu.memory_space<vmem>>, %arg2: memref<128x128xbf16, #tpu.memory_space<vmem>>, %arg3: memref<128x1xf32, #tpu.memory_space<vmem>>, %arg4: memref<128x128xf32, #tpu.memory_space<vmem>>, %arg5: memref<1x128xf32, #tpu.memory_space<vmem>>, %arg6: memref<128x128xf32, #tpu.memory_space<vmem>>) attributes {dimension_semantics = [#tpu.dimension_semantics<parallel>], iteration_bounds = array<i64: 1>, scalar_prefetch = 0 : i64, scratch_operands = 0 : i64, tpu.core_type = #tpu.core_type<tc>, window_params = [{transform_indices = @transform_0, window_bounds = array<i64: 128, 128>}, {pipeline_mode = #tpu.pipeline_mode<synchronous>, transform_indices = @transform_1, window_bounds = array<i64: 128, 128>}, {transform_indices = @transform_2, window_bounds = array<i64: 128, 1>}, {pipeline_mode = #tpu.pipeline_mode<synchronous>, transform_indices = @transform_3, window_bounds = array<i64: 128, 128>}, {pipeline_mode = #tpu.pipeline_mode<synchronous>, transform_indices = @transform_4, window_bounds = array<i64: 1, 128>}, {transform_indices = @transform_5, window_bounds = array<i64: 128, 128>}]} {
    %c0 = arith.constant 0 : index
    %c0_0 = arith.constant 0 : index
    %0 = vector.load %arg1[%c0, %c0_0] : memref<128x128xi8, #tpu.memory_space<vmem>>, vector<128x128xi8>
    %1 = arith.sitofp %0 : vector<128x128xi8> to vector<128x128xbf16>
    %c0_1 = arith.constant 0 : index
    %c0_2 = arith.constant 0 : index
    %2 = vector.load %arg2[%c0_1, %c0_2] : memref<128x128xbf16, #tpu.memory_space<vmem>>, vector<128x128xbf16>
    %cst = arith.constant dense<0.000000e+00> : vector<128x128xf32>
    %3 = tpu.matmul %1, %2, %cst {dimension_numbers = #tpu.dot_dimension_numbers<[1], [0], [0], [1], [0, 0, 1, 1], [], []>} : vector<128x128xbf16>, vector<128x128xbf16>, vector<128x128xf32> -> vector<128x128xf32>
    %c0_3 = arith.constant 0 : index
    %c0_4 = arith.constant 0 : index
    %4 = vector.load %arg3[%c0_3, %c0_4] : memref<128x1xf32, #tpu.memory_space<vmem>>, vector<128x1xf32>
    %c0_5 = arith.constant 0 : index
    %c0_6 = arith.constant 0 : index
    %5 = vector.load %arg4[%c0_5, %c0_6] : memref<128x128xf32, #tpu.memory_space<vmem>>, vector<128x128xf32>
    %c0_7 = arith.constant 0 : index
    %c0_8 = arith.constant 0 : index
    %6 = vector.load %arg5[%c0_7, %c0_8] : memref<1x128xf32, #tpu.memory_space<vmem>>, vector<1x128xf32>
    %cst_9 = arith.constant dense<0.000000e+00> : vector<128x128xf32>
    %7 = tpu.matmul %3, %5, %cst_9 {dimension_numbers = #tpu.dot_dimension_numbers<[1], [0], [0], [1], [0, 0, 1, 1], [], []>} : vector<128x128xf32>, vector<128x128xf32>, vector<128x128xf32> -> vector<128x128xf32>
    %8 = vector.broadcast %4 : vector<128x1xf32> to vector<128x128xf32>
    %9 = arith.mulf %7, %8 : vector<128x128xf32>
    %10 = vector.broadcast %6 : vector<1x128xf32> to vector<128x128xf32>
    %11 = arith.addf %9, %10 : vector<128x128xf32>
    %12 = tpu.iota {dimensions = array<i32: 1>} : vector<128x128xi32>
    %c8_i32 = arith.constant 8 : i32
    %13 = vector.broadcast %c8_i32 : i32 to vector<128x128xi32>
    %14 = arith.cmpi slt, %12, %13 : vector<128x128xi32>
    %cst_10 = arith.constant 0xFF800000 : f32
    %15 = vector.broadcast %cst_10 : f32 to vector<128x128xf32>
    %16 = arith.select %14, %11, %15 : vector<128x128xi1>, vector<128x128xf32>
    %cst_11 = arith.constant dense<0xFF800000> : vector<128xf32>
    %17 = vector.multi_reduction <maximumf>, %16, %cst_11 [1] : vector<128x128xf32> to vector<128xf32>
    %18 = vector.shape_cast %17 : vector<128xf32> to vector<128x1xf32>
    %19 = vector.broadcast %18 : vector<128x1xf32> to vector<128x128xf32>
    %20 = arith.subf %11, %19 : vector<128x128xf32>
    %21 = math.exp %20 : vector<128x128xf32>
    %cst_12 = arith.constant 0.000000e+00 : f32
    %22 = vector.broadcast %cst_12 : f32 to vector<128x128xf32>
    %23 = arith.select %14, %21, %22 : vector<128x128xi1>, vector<128x128xf32>
    %cst_13 = arith.constant dense<0.000000e+00> : vector<128xf32>
    %24 = vector.multi_reduction <add>, %23, %cst_13 [1] : vector<128x128xf32> to vector<128xf32>
    %25 = vector.shape_cast %24 : vector<128xf32> to vector<128x1xf32>
    %26 = math.log %25 : vector<128x1xf32>
    %27 = arith.addf %18, %26 : vector<128x1xf32>
    %28 = vector.broadcast %27 : vector<128x1xf32> to vector<128x128xf32>
    %29 = arith.subf %11, %28 : vector<128x128xf32>
    %c0_14 = arith.constant 0 : index
    %c0_15 = arith.constant 0 : index
    %30 = vector.load %arg6[%c0_14, %c0_15] : memref<128x128xf32, #tpu.memory_space<vmem>>, vector<128x128xf32>
    tpu.vector_store %arg6[%c0_14, %c0_15], %29 {strides = array<i32>} : memref<128x128xf32, #tpu.memory_space<vmem>>, vector<128x128xf32>,
    return
  }
  func.func @transform_0(%arg0: i32) -> (i32, i32) {
    %c0_i32 = arith.constant 0 : i32
    %c0_i32_0 = arith.constant 0 : i32
    return %arg0, %c0_i32 : i32, i32
  }
  func.func @transform_1(%arg0: i32) -> (i32, i32) {
    %c0_i32 = arith.constant 0 : i32
    %c0_i32_0 = arith.constant 0 : i32
    %c0_i32_1 = arith.constant 0 : i32
    return %c0_i32, %c0_i32_0 : i32, i32
  }
  func.func @transform_2(%arg0: i32) -> (i32, i32) {
    %c0_i32 = arith.constant 0 : i32
    %c0_i32_0 = arith.constant 0 : i32
    return %arg0, %c0_i32 : i32, i32
  }
  func.func @transform_3(%arg0: i32) -> (i32, i32) {
    %c0_i32 = arith.constant 0 : i32
    %c0_i32_0 = arith.constant 0 : i32
    %c0_i32_1 = arith.constant 0 : i32
    return %c0_i32, %c0_i32_0 : i32, i32
  }
  func.func @transform_4(%arg0: i32) -> (i32, i32) {
    %c0_i32 = arith.constant 0 : i32
    %c0_i32_0 = arith.constant 0 : i32
    %c0_i32_1 = arith.constant 0 : i32
    return %c0_i32, %c0_i32_0 : i32, i32
  }
  func.func @transform_5(%arg0: i32) -> (i32, i32) {
    %c0_i32 = arith.constant 0 : i32
    %c0_i32_0 = arith.constant 0 : i32
    return %arg0, %c0_i32 : i32, i32
  }
}

</mosaic_0001>

<llo_original>
// kernel: gcn_model_forward.3
$region0: #{gcn_model_forward.3}
  #allocation0 [shape = 'u32[]', space=smem, size = 0x4, offset = 0x4, fixed_abs, tag = 'smem constant byte address 0x4 - core index']
  #allocation1 [shape = 'u32[144,128]{1,0:T(1,128)}', space=vmem, size = 0x12000, scoped, tag = 'internal scratch']
  %s0 = inlined_call_operand.vmem [shape: s8[128,128], index: 0, kind: input, shape index: {}]
  %s1 = inlined_call_operand.vmem [shape: bf16[128,128], index: 1, kind: input, shape index: {}]
  %s2 = inlined_call_operand.vmem [shape: f32[128,1], index: 2, kind: input, shape index: {}]
  %s3 = inlined_call_operand.vmem [shape: f32[128,128], index: 3, kind: input, shape index: {}]
  %s4 = inlined_call_operand.vmem [shape: f32[1,128], index: 4, kind: input, shape index: {}]
  %s5 = inlined_call_operand.vmem [shape: f32[128,128], index: 5, kind: output, shape index: {}]
  %s6 = sld [smem:[#allocation0]]
  $region30: #{gcn_model_forward.3} parent=0
    _
  %s8 = ssub.s32 1, %s6
  %s9 = scalar_select 0, %s8, %s6
  // Predicated region
  $region2: #{gcn_model_forward.3} parent=0 // pred_check
    _
  $region3: #{gcn_model_forward.3} parent=0 // pred_check_branch
    %11 = sbr.rel (0) target = $region5
  $region4: #{gcn_model_forward.3} parent=0 // pred_region
    _
  $region5: #{gcn_model_forward.3} parent=0 // pred_fallthru
    _
  // Predicated region
  $region6: #{gcn_model_forward.3} parent=0 // pred_check
    _
  $region7: #{gcn_model_forward.3} parent=0 // pred_check_branch
    %13 = sbr.rel (0) target = $region9
  $region8: #{gcn_model_forward.3} parent=0 // pred_region
    _
  $region9: #{gcn_model_forward.3} parent=0 // pred_fallthru
    _
  // Predicated region
  $region10: #{gcn_model_forward.3} parent=0 // pred_check
    _
  $region11: #{gcn_model_forward.3} parent=0 // pred_check_branch
    %15 = sbr.rel (0) target = $region13
  $region12: #{gcn_model_forward.3} parent=0 // pred_region
    _
  $region13: #{gcn_model_forward.3} parent=0 // pred_fallthru
    _
  // Predicated region
  $region14: #{gcn_model_forward.3} parent=0 // pred_check
    _
  $region15: #{gcn_model_forward.3} parent=0 // pred_check_branch
    %17 = sbr.rel (0) target = $region17
  $region16: #{gcn_model_forward.3} parent=0 // pred_region
    _
  $region17: #{gcn_model_forward.3} parent=0 // pred_fallthru
    _
  // Predicated region
  $region18: #{gcn_model_forward.3} parent=0 // pred_check
    _
  $region19: #{gcn_model_forward.3} parent=0 // pred_check_branch
    %19 = sbr.rel (0) target = $region21
  $region20: #{gcn_model_forward.3} parent=0 // pred_region
    _
  $region21: #{gcn_model_forward.3} parent=0 // pred_fallthru
    _
  %v21 = vld [vmem:[%s0] sm:$0xff]
  %v22 = vld [vmem:[%s0 + $0x8] sm:$0xff]
  %v23 = vld [vmem:[%s0 + $0x10] sm:$0xff]
  %v24 = vld [vmem:[%s0 + $0x18] sm:$0xff]
  %v25 = vunpack.c.l.s8.bf16 %v21
  %v26 = vunpack.c.h.s8.bf16 %v21
  %v27 = vunpack.c.l.s8.bf16 %v22
  %v28 = vunpack.c.h.s8.bf16 %v22
  %v29 = vunpack.c.l.s8.bf16 %v23
  %v30 = vunpack.c.h.s8.bf16 %v23
  %v31 = vunpack.c.l.s8.bf16 %v24
  %v32 = vunpack.c.h.s8.bf16 %v24
  %v33 = vld [vmem:[%s1] sm:$0xf]
  %v34 = vld [vmem:[%s1 + $0x4] sm:$0xf]
  %v35 = vld [vmem:[%s1 + $0x8] sm:$0xf]
  %v36 = vld [vmem:[%s1 + $0xc] sm:$0xf]
  %v37 = vld [vmem:[%s1 + $0x10] sm:$0xf]
  %v38 = vld [vmem:[%s1 + $0x14] sm:$0xf]
  %v39 = vld [vmem:[%s1 + $0x18] sm:$0xf]
  %v40 = vld [vmem:[%s1 + $0x1c] sm:$0xf]
  %v41 = vld [vmem:[%s1 + $0x20] sm:$0xf]
  %v42 = vld [vmem:[%s1 + $0x24] sm:$0xf]
  %v43 = vld [vmem:[%s1 + $0x28] sm:$0xf]
  %v44 = vld [vmem:[%s1 + $0x2c] sm:$0xf]
  %v45 = vld [vmem:[%s1 + $0x30] sm:$0xf]
  %v46 = vld [vmem:[%s1 + $0x34] sm:$0xf]
  %v47 = vld [vmem:[%s1 + $0x38] sm:$0xf]
  %v48 = vld [vmem:[%s1 + $0x3c] sm:$0xf]
  %v65 = vunpack.c.l.b16 %v33
  %v66 = vunpack.c.l.b16 %v34
  %v67 = vunpack.c.l.b16 %v35
  %v68 = vunpack.c.l.b16 %v36
  %v69 = vunpack.c.l.b16 %v37
  %v70 = vunpack.c.l.b16 %v38
  %v71 = vunpack.c.l.b16 %v39
  %v72 = vunpack.c.l.b16 %v40
  %v73 = vunpack.c.l.b16 %v41
  %v74 = vunpack.c.l.b16 %v42
  %v75 = vunpack.c.l.b16 %v43
  %v76 = vunpack.c.l.b16 %v44
  %v77 = vunpack.c.l.b16 %v45
  %v78 = vunpack.c.l.b16 %v46
  %v79 = vunpack.c.l.b16 %v47
  %v80 = vunpack.c.l.b16 %v48
  %v81 = vpack.c.b16 %v66, %v65
  %v82 = vpack.c.b16 %v68, %v67
  %v83 = vpack.c.b16 %v70, %v69
  %v84 = vpack.c.b16 %v72, %v71
  %v85 = vpack.c.b16 %v74, %v73
  %v86 = vpack.c.b16 %v76, %v75
  %v87 = vpack.c.b16 %v78, %v77
  %v88 = vpack.c.b16 %v80, %v79
  %97 = vmatprep.subr.bf16.mxu0 0
  %98 = vmatpush1.bf16.msra.mxu0 %v81
  %99 = vmatprep.subr.bf16.mxu0 0
  %100 = vmatpush1.bf16.msra.mxu0 %v82
  %101 = vmatprep.subr.bf16.mxu0 0
  %102 = vmatpush1.bf16.msra.mxu0 %v83
  %103 = vmatprep.subr.bf16.mxu0 0
  %104 = vmatpush1.bf16.msra.mxu0 %v84
  %105 = vmatprep.subr.bf16.mxu0 0
  %106 = vmatpush1.bf16.msra.mxu0 %v85
  %107 = vmatprep.subr.bf16.mxu0 0
  %108 = vmatpush1.bf16.msra.mxu0 %v86
  %109 = vmatprep.subr.bf16.mxu0 0
  %110 = vmatpush1.bf16.msra.mxu0 %v87
  %111 = vmatprep.subr.bf16.mxu0 0
  %112 = vmatpush1.bf16.msra.mxu0 %v88
  %113 = vmatprep.subr.bf16.mxu0 0
  %114 = vmatpush1.bf16.msra.mxu0 0
  %115 = vmatprep.subr.bf16.mxu0 0
  %116 = vmatpush1.bf16.msra.mxu0 0
  %117 = vmatprep.subr.bf16.mxu0 0
  %118 = vmatpush1.bf16.msra.mxu0 0
  %119 = vmatprep.subr.bf16.mxu0 0
  %120 = vmatpush1.bf16.msra.mxu0 0
  %121 = vmatprep.subr.bf16.mxu0 0
  %122 = vmatpush1.bf16.msra.mxu0 0
  %123 = vmatprep.subr.bf16.mxu0 0
  %124 = vmatpush1.bf16.msra.mxu0 0
  %125 = vmatprep.subr.bf16.mxu0 0
  %126 = vmatpush1.bf16.msra.mxu0 0
  %127 = vmatprep.subr.bf16.mxu0 0
  %128 = vmatpush1.bf16.msra.mxu0 0
  %129 = vmatprep.mubr.bf16.mxu0 0
  %130 = vmatmul.mubr.bf16.gmra.mrb[0].mxu0 %v25
  %v131 = vpop.f32.mrb[0].mxu0
  %v132 = vadd.f32 0.0, %v131
  %v133 = vpop.f32.mrb[0].mxu0
  %v134 = vpop.f32.mrb[0].mxu0
  %v135 = vadd.f32 0.0, %v134
  %v136 = vpop.f32.mrb[0].mxu0
  %137 = vmatprep.mubr.bf16.mxu0 0
  %138 = vmatmul.mubr.bf16.gmra.mrb[0].mxu0 %v26
  %v139 = vpop.f32.mrb[0].mxu0
  %v140 = vadd.f32 0.0, %v139
  %v141 = vpop.f32.mrb[0].mxu0
  %v142 = vpop.f32.mrb[0].mxu0
  %v143 = vadd.f32 0.0, %v142
  %v144 = vpop.f32.mrb[0].mxu0
  %145 = vmatprep.mubr.bf16.mxu0 0
  %146 = vmatmul.mubr.bf16.gmra.mrb[0].mxu0 %v27
  %v147 = vpop.f32.mrb[0].mxu0
  %v148 = vadd.f32 0.0, %v147
  %v149 = vpop.f32.mrb[0].mxu0
  %v150 = vpop.f32.mrb[0].mxu0
  %v151 = vadd.f32 0.0, %v150
  %v152 = vpop.f32.mrb[0].mxu0
  %153 = vmatprep.mubr.bf16.mxu0 0
  %154 = vmatmul.mubr.bf16.gmra.mrb[0].mxu0 %v28
  %v155 = vpop.f32.mrb[0].mxu0
  %v156 = vadd.f32 0.0, %v155
  %v157 = vpop.f32.mrb[0].mxu0
  %v158 = vpop.f32.mrb[0].mxu0
  %v159 = vadd.f32 0.0, %v158
  %v160 = vpop.f32.mrb[0].mxu0
  %161 = vmatprep.mubr.bf16.mxu0 0
  %162 = vmatmul.mubr.bf16.gmra.mrb[0].mxu0 %v29
  %v163 = vpop.f32.mrb[0].mxu0
  %v164 = vadd.f32 0.0, %v163
  %v165 = vpop.f32.mrb[0].mxu0
  %v166 = vpop.f32.mrb[0].mxu0
  %v167 = vadd.f32 0.0, %v166
  %v168 = vpop.f32.mrb[0].mxu0
  %169 = vmatprep.mubr.bf16.mxu0 0
  %170 = vmatmul.mubr.bf16.gmra.mrb[0].mxu0 %v30
  %v171 = vpop.f32.mrb[0].mxu0
  %v172 = vadd.f32 0.0, %v171
  %v173 = vpop.f32.mrb[0].mxu0
  %v174 = vpop.f32.mrb[0].mxu0
  %v175 = vadd.f32 0.0, %v174
  %v176 = vpop.f32.mrb[0].mxu0
  %177 = vmatprep.mubr.bf16.mxu0 0
  %178 = vmatmul.mubr.bf16.gmra.mrb[0].mxu0 %v31
  %v179 = vpop.f32.mrb[0].mxu0
  %v180 = vadd.f32 0.0, %v179
  %v181 = vpop.f32.mrb[0].mxu0
  %v182 = vpop.f32.mrb[0].mxu0
  %v183 = vadd.f32 0.0, %v182
  %v184 = vpop.f32.mrb[0].mxu0
  %185 = vmatprep.mubr.bf16.mxu0 0
  %186 = vmatmul.mubr.bf16.gmra.mrb[0].mxu0 %v32
  %v187 = vpop.f32.mrb[0].mxu0
  %v188 = vadd.f32 0.0, %v187
  %v189 = vpop.f32.mrb[0].mxu0
  %v190 = vpop.f32.mrb[0].mxu0
  %v191 = vadd.f32 0.0, %v190
  %v192 = vpop.f32.mrb[0].mxu0
  %193 = vdwg.mxu0
  %v194 = vld [vmem:[%s2] sm:$0xff]
  %v195 = vld [vmem:[%s2 + $0x8] sm:$0xff]
  %v196 = vld [vmem:[%s2 + $0x10] sm:$0xff]
  %v197 = vld [vmem:[%s2 + $0x18] sm:$0xff]
  %v198 = vld [vmem:[%s2 + $0x20] sm:$0xff]
  %v199 = vld [vmem:[%s2 + $0x28] sm:$0xff]
  %v200 = vld [vmem:[%s2 + $0x30] sm:$0xff]
  %v201 = vld [vmem:[%s2 + $0x38] sm:$0xff]
  %v202 = vld [vmem:[%s2 + $0x40] sm:$0xff]
  %v203 = vld [vmem:[%s2 + $0x48] sm:$0xff]
  %v204 = vld [vmem:[%s2 + $0x50] sm:$0xff]
  %v205 = vld [vmem:[%s2 + $0x58] sm:$0xff]
  %v206 = vld [vmem:[%s2 + $0x60] sm:$0xff]
  %v207 = vld [vmem:[%s2 + $0x68] sm:$0xff]
  %v208 = vld [vmem:[%s2 + $0x70] sm:$0xff]
  %v209 = vld [vmem:[%s2 + $0x78] sm:$0xff]
  %v210 = vld [vmem:[%s3] sm:$0xff]
  %v211 = vld [vmem:[%s3 + $0x8] sm:$0xff]
  %v212 = vld [vmem:[%s3 + $0x10] sm:$0xff]
  %v213 = vld [vmem:[%s3 + $0x18] sm:$0xff]
  %v214 = vld [vmem:[%s3 + $0x20] sm:$0xff]
  %v215 = vld [vmem:[%s3 + $0x28] sm:$0xff]
  %v216 = vld [vmem:[%s3 + $0x30] sm:$0xff]
  %v217 = vld [vmem:[%s3 + $0x38] sm:$0xff]
  %v218 = vld [vmem:[%s3 + $0x40] sm:$0xff]
  %v219 = vld [vmem:[%s3 + $0x48] sm:$0xff]
  %v220 = vld [vmem:[%s3 + $0x50] sm:$0xff]
  %v221 = vld [vmem:[%s3 + $0x58] sm:$0xff]
  %v222 = vld [vmem:[%s3 + $0x60] sm:$0xff]
  %v223 = vld [vmem:[%s3 + $0x68] sm:$0xff]
  %v224 = vld [vmem:[%s3 + $0x70] sm:$0xff]
  %v225 = vld [vmem:[%s3 + $0x78] sm:$0xff]
  %v226 = vld [vmem:[%s4] sm:$0x1]
  %227 = vmatprep.subr.mxu0 0.0
  %228 = vmatpush1.msra.mxu0 %v210
  %229 = vmatprep.subr.mxu0 0.0
  %230 = vmatpush1.msra.mxu0 %v211
  %231 = vmatprep.subr.mxu0 0.0
  %232 = vmatpush1.msra.mxu0 %v212
  %233 = vmatprep.subr.mxu0 0.0
  %234 = vmatpush1.msra.mxu0 %v213
  %235 = vmatprep.subr.mxu0 0.0
  %236 = vmatpush1.msra.mxu0 %v214
  %237 = vmatprep.subr.mxu0 0.0
  %238 = vmatpush1.msra.mxu0 %v215
  %239 = vmatprep.subr.mxu0 0.0
  %240 = vmatpush1.msra.mxu0 %v216
  %241 = vmatprep.subr.mxu0 0.0
  %242 = vmatpush1.msra.mxu0 %v217
  %243 = vmatprep.subr.mxu0 0.0
  %244 = vmatpush1.msra.mxu0 %v218
  %245 = vmatprep.subr.mxu0 0.0
  %246 = vmatpush1.msra.mxu0 %v219
  %247 = vmatprep.subr.mxu0 0.0
  %248 = vmatpush1.msra.mxu0 %v220
  %249 = vmatprep.subr.mxu0 0.0
  %250 = vmatpush1.msra.mxu0 %v221
  %251 = vmatprep.subr.mxu0 0.0
  %252 = vmatpush1.msra.mxu0 %v222
  %253 = vmatprep.subr.mxu0 0.0
  %254 = vmatpush1.msra.mxu0 %v223
  %255 = vmatprep.subr.mxu0 0.0
  %256 = vmatpush1.msra.mxu0 %v224
  %257 = vmatprep.subr.mxu0 0.0
  %258 = vmatpush1.msra.mxu0 %v225
  %259 = vmatprep.subr.mxu0 0.0
  %260 = vmatpush1.msra.mxu0 0.0
  %261 = vmatprep.subr.mxu0 0.0
  %262 = vmatpush1.msra.mxu0 0.0
  %263 = vmatprep.subr.mxu0 0.0
  %264 = vmatpush1.msra.mxu0 0.0
  %265 = vmatprep.subr.mxu0 0.0
  %266 = vmatpush1.msra.mxu0 0.0
  %267 = vmatprep.subr.mxu0 0.0
  %268 = vmatpush1.msra.mxu0 0.0
  %269 = vmatprep.subr.mxu0 0.0
  %270 = vmatpush1.msra.mxu0 0.0
  %271 = vmatprep.subr.mxu0 0.0
  %272 = vmatpush1.msra.mxu0 0.0
  %273 = vmatprep.subr.mxu0 0.0
  %274 = vmatpush1.msra.mxu0 0.0
  %275 = vmatprep.subr.mxu0 0.0
  %276 = vmatpush1.msra.mxu0 0.0
  %277 = vmatprep.subr.mxu0 0.0
  %278 = vmatpush1.msra.mxu0 0.0
  %279 = vmatprep.subr.mxu0 0.0
  %280 = vmatpush1.msra.mxu0 0.0
  %281 = vmatprep.subr.mxu0 0.0
  %282 = vmatpush1.msra.mxu0 0.0
  %283 = vmatprep.subr.mxu0 0.0
  %284 = vmatpush1.msra.mxu0 0.0
  %285 = vmatprep.subr.mxu0 0.0
  %286 = vmatpush1.msra.mxu0 0.0
  %287 = vmatprep.subr.mxu0 0.0
  %288 = vmatpush1.msra.mxu0 0.0
  %289 = vmatprep.subr.mxu0 0.0
  %290 = vmatpush1.msra.mxu0 0.0
  %291 = vmatprep.mubr.f32.mxu0 0.0
  %292 = vmatmul.mubr.f32.gmra.mrb[0].mxu0 %v132
  %v293 = vpop.f32.mrb[0].mxu0
  %v294 = vadd.f32 0.0, %v293
  %v295 = vpop.f32.mrb[0].mxu0
  %296 = vmatprep.mubr.f32.mxu0 0.0
  %297 = vmatmul.mubr.f32.gmra.mrb[0].mxu0 %v135
  %v298 = vpop.f32.mrb[0].mxu0
  %v299 = vadd.f32 0.0, %v298
  %v300 = vpop.f32.mrb[0].mxu0
  %301 = vmatprep.mubr.f32.mxu0 0.0
  %302 = vmatmul.mubr.f32.gmra.mrb[0].mxu0 %v140
  %v303 = vpop.f32.mrb[0].mxu0
  %v304 = vadd.f32 0.0, %v303
  %v305 = vpop.f32.mrb[0].mxu0
  %306 = vmatprep.mubr.f32.mxu0 0.0
  %307 = vmatmul.mubr.f32.gmra.mrb[0].mxu0 %v143
  %v308 = vpop.f32.mrb[0].mxu0
  %v309 = vadd.f32 0.0, %v308
  %v310 = vpop.f32.mrb[0].mxu0
  %311 = vmatprep.mubr.f32.mxu0 0.0
  %312 = vmatmul.mubr.f32.gmra.mrb[0].mxu0 %v148
  %v313 = vpop.f32.mrb[0].mxu0
  %v314 = vadd.f32 0.0, %v313
  %v315 = vpop.f32.mrb[0].mxu0
  %316 = vmatprep.mubr.f32.mxu0 0.0
  %317 = vmatmul.mubr.f32.gmra.mrb[0].mxu0 %v151
  %v318 = vpop.f32.mrb[0].mxu0
  %v319 = vadd.f32 0.0, %v318
  %v320 = vpop.f32.mrb[0].mxu0
  %321 = vmatprep.mubr.f32.mxu0 0.0
  %322 = vmatmul.mubr.f32.gmra.mrb[0].mxu0 %v156
  %v323 = vpop.f32.mrb[0].mxu0
  %v324 = vadd.f32 0.0, %v323
  %v325 = vpop.f32.mrb[0].mxu0
  %326 = vmatprep.mubr.f32.mxu0 0.0
  %327 = vmatmul.mubr.f32.gmra.mrb[0].mxu0 %v159
  %v328 = vpop.f32.mrb[0].mxu0
  %v329 = vadd.f32 0.0, %v328
  %v330 = vpop.f32.mrb[0].mxu0
  %331 = vmatprep.mubr.f32.mxu0 0.0
  %332 = vmatmul.mubr.f32.gmra.mrb[0].mxu0 %v164
  %v333 = vpop.f32.mrb[0].mxu0
  %v334 = vadd.f32 0.0, %v333
  %v335 = vpop.f32.mrb[0].mxu0
  %336 = vmatprep.mubr.f32.mxu0 0.0
  %337 = vmatmul.mubr.f32.gmra.mrb[0].mxu0 %v167
  %v338 = vpop.f32.mrb[0].mxu0
  %v339 = vadd.f32 0.0, %v338
  %v340 = vpop.f32.mrb[0].mxu0
  %341 = vmatprep.mubr.f32.mxu0 0.0
  %342 = vmatmul.mubr.f32.gmra.mrb[0].mxu0 %v172
  %v343 = vpop.f32.mrb[0].mxu0
  %v344 = vadd.f32 0.0, %v343
  %v345 = vpop.f32.mrb[0].mxu0
  %346 = vmatprep.mubr.f32.mxu0 0.0
  %347 = vmatmul.mubr.f32.gmra.mrb[0].mxu0 %v175
  %v348 = vpop.f32.mrb[0].mxu0
  %v349 = vadd.f32 0.0, %v348
  %v350 = vpop.f32.mrb[0].mxu0
  %351 = vmatprep.mubr.f32.mxu0 0.0
  %352 = vmatmul.mubr.f32.gmra.mrb[0].mxu0 %v180
  %v353 = vpop.f32.mrb[0].mxu0
  %v354 = vadd.f32 0.0, %v353
  %v355 = vpop.f32.mrb[0].mxu0
  %356 = vmatprep.mubr.f32.mxu0 0.0
  %357 = vmatmul.mubr.f32.gmra.mrb[0].mxu0 %v183
  %v358 = vpop.f32.mrb[0].mxu0
  %v359 = vadd.f32 0.0, %v358
  %v360 = vpop.f32.mrb[0].mxu0
  %361 = vmatprep.mubr.f32.mxu0 0.0
  %362 = vmatmul.mubr.f32.gmra.mrb[0].mxu0 %v188
  %v363 = vpop.f32.mrb[0].mxu0
  %v364 = vadd.f32 0.0, %v363
  %v365 = vpop.f32.mrb[0].mxu0
  %366 = vmatprep.mubr.f32.mxu0 0.0
  %367 = vmatmul.mubr.f32.gmra.mrb[0].mxu0 %v191
  %v368 = vpop.f32.mrb[0].mxu0
  %v369 = vadd.f32 0.0, %v368
  %v370 = vpop.f32.mrb[0].mxu0
  %371 = vdwg.mxu0
  %373 = vset.pattern.permute.xlu0 0
  %374 = vperm.xlu0 %373, %v194
  %v375 = vpop.permute.xlu0 %374
  %378 = vset.pattern.permute.xlu0 0
  %379 = vperm.xlu0 %378, %v195
  %v380 = vpop.permute.xlu0 %379
  %383 = vset.pattern.permute.xlu0 0
  %384 = vperm.xlu0 %383, %v196
  %v385 = vpop.permute.xlu0 %384
  %388 = vset.pattern.permute.xlu0 0
  %389 = vperm.xlu0 %388, %v197
  %v390 = vpop.permute.xlu0 %389
  %393 = vset.pattern.permute.xlu0 0
  %394 = vperm.xlu0 %393, %v198
  %v395 = vpop.permute.xlu0 %394
  %398 = vset.pattern.permute.xlu0 0
  %399 = vperm.xlu0 %398, %v199
  %v400 = vpop.permute.xlu0 %399
  %403 = vset.pattern.permute.xlu0 0
  %404 = vperm.xlu0 %403, %v200
  %v405 = vpop.permute.xlu0 %404
  %408 = vset.pattern.permute.xlu0 0
  %409 = vperm.xlu0 %408, %v201
  %v410 = vpop.permute.xlu0 %409
  %413 = vset.pattern.permute.xlu0 0
  %414 = vperm.xlu0 %413, %v202
  %v415 = vpop.permute.xlu0 %414
  %418 = vset.pattern.permute.xlu0 0
  %419 = vperm.xlu0 %418, %v203
  %v420 = vpop.permute.xlu0 %419
  %423 = vset.pattern.permute.xlu0 0
  %424 = vperm.xlu0 %423, %v204
  %v425 = vpop.permute.xlu0 %424
  %428 = vset.pattern.permute.xlu0 0
  %429 = vperm.xlu0 %428, %v205
  %v430 = vpop.permute.xlu0 %429
  %433 = vset.pattern.permute.xlu0 0
  %434 = vperm.xlu0 %433, %v206
  %v435 = vpop.permute.xlu0 %434
  %438 = vset.pattern.permute.xlu0 0
  %439 = vperm.xlu0 %438, %v207
  %v440 = vpop.permute.xlu0 %439
  %443 = vset.pattern.permute.xlu0 0
  %444 = vperm.xlu0 %443, %v208
  %v445 = vpop.permute.xlu0 %444
  %448 = vset.pattern.permute.xlu0 0
  %449 = vperm.xlu0 %448, %v209
  %v450 = vpop.permute.xlu0 %449
  %v452 = vmul.f32 %v294, %v375
  %v453 = vmul.f32 %v299, %v380
  %v454 = vmul.f32 %v304, %v385
  %v455 = vmul.f32 %v309, %v390
  %v456 = vmul.f32 %v314, %v395
  %v457 = vmul.f32 %v319, %v400
  %v458 = vmul.f32 %v324, %v405
  %v459 = vmul.f32 %v329, %v410
  %v460 = vmul.f32 %v334, %v415
  %v461 = vmul.f32 %v339, %v420
  %v462 = vmul.f32 %v344, %v425
  %v463 = vmul.f32 %v349, %v430
  %v464 = vmul.f32 %v354, %v435
  %v465 = vmul.f32 %v359, %v440
  %v466 = vmul.f32 %v364, %v445
  %v467 = vmul.f32 %v369, %v450
  %v469 = vlaneseq
  %v470 = vshrl.u32 %v469, 7
  %v471 = vsub.s32 0, %v470
  %v472 = vrot.slane %v226, %v471
  %v474 = vadd.f32 %v452, %v472
  %v475 = vadd.f32 %v453, %v472
  %v476 = vadd.f32 %v454, %v472
  %v477 = vadd.f32 %v455, %v472
  %v478 = vadd.f32 %v456, %v472
  %v479 = vadd.f32 %v457, %v472
  %v480 = vadd.f32 %v458, %v472
  %v481 = vadd.f32 %v459, %v472
  %v482 = vadd.f32 %v460, %v472
  %v483 = vadd.f32 %v461, %v472
  %v484 = vadd.f32 %v462, %v472
  %v485 = vadd.f32 %v463, %v472
  %v486 = vadd.f32 %v464, %v472
  %v487 = vadd.f32 %v465, %v472
  %v488 = vadd.f32 %v466, %v472
  %v489 = vadd.f32 %v467, %v472
  %v490 = vmax.f32 %v474, 0.0
  %v491 = vmax.f32 %v475, 0.0
  %v492 = vmax.f32 %v476, 0.0
  %v493 = vmax.f32 %v477, 0.0
  %v494 = vmax.f32 %v478, 0.0
  %v495 = vmax.f32 %v479, 0.0
  %v496 = vmax.f32 %v480, 0.0
  %v497 = vmax.f32 %v481, 0.0
  %v498 = vmax.f32 %v482, 0.0
  %v499 = vmax.f32 %v483, 0.0
  %v500 = vmax.f32 %v484, 0.0
  %v501 = vmax.f32 %v485, 0.0
  %v502 = vmax.f32 %v486, 0.0
  %v503 = vmax.f32 %v487, 0.0
  %v504 = vmax.f32 %v488, 0.0
  %v505 = vmax.f32 %v489, 0.0
  %506 = vst [vmem:[%s5] sm:$0xff] %v490
  %507 = vst [vmem:[%s5 + $0x8] sm:$0xff] %v491
  %508 = vst [vmem:[%s5 + $0x10] sm:$0xff] %v492
  %509 = vst [vmem:[%s5 + $0x18] sm:$0xff] %v493
  %510 = vst [vmem:[%s5 + $0x20] sm:$0xff] %v494
  %511 = vst [vmem:[%s5 + $0x28] sm:$0xff] %v495
  %512 = vst [vmem:[%s5 + $0x30] sm:$0xff] %v496
  %513 = vst [vmem:[%s5 + $0x38] sm:$0xff] %v497
  %514 = vst [vmem:[%s5 + $0x40] sm:$0xff] %v498
  %515 = vst [vmem:[%s5 + $0x48] sm:$0xff] %v499
  %516 = vst [vmem:[%s5 + $0x50] sm:$0xff] %v500
  %517 = vst [vmem:[%s5 + $0x58] sm:$0xff] %v501
  %518 = vst [vmem:[%s5 + $0x60] sm:$0xff] %v502
  %519 = vst [vmem:[%s5 + $0x68] sm:$0xff] %v503
  %520 = vst [vmem:[%s5 + $0x70] sm:$0xff] %v504
  %521 = vst [vmem:[%s5 + $0x78] sm:$0xff] %v505
  // Predicated region
  $region22: #{gcn_model_forward.3} parent=0 // pred_check
    _
  $region23: #{gcn_model_forward.3} parent=0 // pred_check_branch
    %523 = sbr.rel (0) target = $region25
  $region24: #{gcn_model_forward.3} parent=0 // pred_region
    _
  $region25: #{gcn_model_forward.3} parent=0 // pred_fallthru
    _
  // Predicated region
  $region26: #{gcn_model_forward.3} parent=0 // pred_check
    _
  $region27: #{gcn_model_forward.3} parent=0 // pred_check_branch
    %525 = sbr.rel (0) target = $region29
  $region28: #{gcn_model_forward.3} parent=0 // pred_region
    _
  $region29: #{gcn_model_forward.3} parent=0 // pred_fallthru
    _

// kernel: gcn_model_forward.5
$region0: #{gcn_model_forward.5}
  #allocation0 [shape = 'u32[]', space=smem, size = 0x4, offset = 0x4, fixed_abs, tag = 'smem constant byte address 0x4 - core index']
  #allocation1 [shape = 'u32[144,128]{1,0:T(1,128)}', space=vmem, size = 0x12000, scoped, tag = 'internal scratch']
  %s0 = inlined_call_operand.vmem [shape: s8[128,128], index: 0, kind: input, shape index: {}]
  %s1 = inlined_call_operand.vmem [shape: bf16[128,128], index: 1, kind: input, shape index: {}]
  %s2 = inlined_call_operand.vmem [shape: f32[128,1], index: 2, kind: input, shape index: {}]
  %s3 = inlined_call_operand.vmem [shape: f32[128,128], index: 3, kind: input, shape index: {}]
  %s4 = inlined_call_operand.vmem [shape: f32[1,128], index: 4, kind: input, shape index: {}]
  %s5 = inlined_call_operand.vmem [shape: f32[128,128], index: 5, kind: output, shape index: {}]
  %s6 = sld [smem:[#allocation0]]
  $region30: #{gcn_model_forward.5} parent=0
    _
  %s8 = ssub.s32 1, %s6
  %s9 = scalar_select 0, %s8, %s6
  // Predicated region
  $region2: #{gcn_model_forward.5} parent=0 // pred_check
    _
  $region3: #{gcn_model_forward.5} parent=0 // pred_check_branch
    %11 = sbr.rel (0) target = $region5
  $region4: #{gcn_model_forward.5} parent=0 // pred_region
    _
  $region5: #{gcn_model_forward.5} parent=0 // pred_fallthru
    _
  // Predicated region
  $region6: #{gcn_model_forward.5} parent=0 // pred_check
    _
  $region7: #{gcn_model_forward.5} parent=0 // pred_check_branch
    %13 = sbr.rel (0) target = $region9
  $region8: #{gcn_model_forward.5} parent=0 // pred_region
    _
  $region9: #{gcn_model_forward.5} parent=0 // pred_fallthru
    _
  // Predicated region
  $region10: #{gcn_model_forward.5} parent=0 // pred_check
    _
  $region11: #{gcn_model_forward.5} parent=0 // pred_check_branch
    %15 = sbr.rel (0) target = $region13
  $region12: #{gcn_model_forward.5} parent=0 // pred_region
    _
  $region13: #{gcn_model_forward.5} parent=0 // pred_fallthru
    _
  // Predicated region
  $region14: #{gcn_model_forward.5} parent=0 // pred_check
    _
  $region15: #{gcn_model_forward.5} parent=0 // pred_check_branch
    %17 = sbr.rel (0) target = $region17
  $region16: #{gcn_model_forward.5} parent=0 // pred_region
    _
  $region17: #{gcn_model_forward.5} parent=0 // pred_fallthru
    _
  // Predicated region
  $region18: #{gcn_model_forward.5} parent=0 // pred_check
    _
  $region19: #{gcn_model_forward.5} parent=0 // pred_check_branch
    %19 = sbr.rel (0) target = $region21
  $region20: #{gcn_model_forward.5} parent=0 // pred_region
    _
  $region21: #{gcn_model_forward.5} parent=0 // pred_fallthru
    _
  %v21 = vld [vmem:[%s0] sm:$0xff]
  %v22 = vld [vmem:[%s0 + $0x8] sm:$0xff]
  %v23 = vld [vmem:[%s0 + $0x10] sm:$0xff]
  %v24 = vld [vmem:[%s0 + $0x18] sm:$0xff]
  %v25 = vunpack.c.l.s8.bf16 %v21
  %v26 = vunpack.c.h.s8.bf16 %v21
  %v27 = vunpack.c.l.s8.bf16 %v22
  %v28 = vunpack.c.h.s8.bf16 %v22
  %v29 = vunpack.c.l.s8.bf16 %v23
  %v30 = vunpack.c.h.s8.bf16 %v23
  %v31 = vunpack.c.l.s8.bf16 %v24
  %v32 = vunpack.c.h.s8.bf16 %v24
  %v33 = vld [vmem:[%s1] sm:$0xf]
  %v34 = vld [vmem:[%s1 + $0x4] sm:$0xf]
  %v35 = vld [vmem:[%s1 + $0x8] sm:$0xf]
  %v36 = vld [vmem:[%s1 + $0xc] sm:$0xf]
  %v37 = vld [vmem:[%s1 + $0x10] sm:$0xf]
  %v38 = vld [vmem:[%s1 + $0x14] sm:$0xf]
  %v39 = vld [vmem:[%s1 + $0x18] sm:$0xf]
  %v40 = vld [vmem:[%s1 + $0x1c] sm:$0xf]
  %v41 = vld [vmem:[%s1 + $0x20] sm:$0xf]
  %v42 = vld [vmem:[%s1 + $0x24] sm:$0xf]
  %v43 = vld [vmem:[%s1 + $0x28] sm:$0xf]
  %v44 = vld [vmem:[%s1 + $0x2c] sm:$0xf]
  %v45 = vld [vmem:[%s1 + $0x30] sm:$0xf]
  %v46 = vld [vmem:[%s1 + $0x34] sm:$0xf]
  %v47 = vld [vmem:[%s1 + $0x38] sm:$0xf]
  %v48 = vld [vmem:[%s1 + $0x3c] sm:$0xf]
  %v65 = vunpack.c.l.b16 %v33
  %v66 = vunpack.c.l.b16 %v34
  %v67 = vunpack.c.l.b16 %v35
  %v68 = vunpack.c.l.b16 %v36
  %v69 = vunpack.c.l.b16 %v37
  %v70 = vunpack.c.l.b16 %v38
  %v71 = vunpack.c.l.b16 %v39
  %v72 = vunpack.c.l.b16 %v40
  %v73 = vunpack.c.l.b16 %v41
  %v74 = vunpack.c.l.b16 %v42
  %v75 = vunpack.c.l.b16 %v43
  %v76 = vunpack.c.l.b16 %v44
  %v77 = vunpack.c.l.b16 %v45
  %v78 = vunpack.c.l.b16 %v46
  %v79 = vunpack.c.l.b16 %v47
  %v80 = vunpack.c.l.b16 %v48
  %v81 = vpack.c.b16 %v66, %v65
  %v82 = vpack.c.b16 %v68, %v67
  %v83 = vpack.c.b16 %v70, %v69
  %v84 = vpack.c.b16 %v72, %v71
  %v85 = vpack.c.b16 %v74, %v73
  %v86 = vpack.c.b16 %v76, %v75
  %v87 = vpack.c.b16 %v78, %v77
  %v88 = vpack.c.b16 %v80, %v79
  %97 = vmatprep.subr.bf16.mxu0 0
  %98 = vmatpush1.bf16.msra.mxu0 %v81
  %99 = vmatprep.subr.bf16.mxu0 0
  %100 = vmatpush1.bf16.msra.mxu0 %v82
  %101 = vmatprep.subr.bf16.mxu0 0
  %102 = vmatpush1.bf16.msra.mxu0 %v83
  %103 = vmatprep.subr.bf16.mxu0 0
  %104 = vmatpush1.bf16.msra.mxu0 %v84
  %105 = vmatprep.subr.bf16.mxu0 0
  %106 = vmatpush1.bf16.msra.mxu0 %v85
  %107 = vmatprep.subr.bf16.mxu0 0
  %108 = vmatpush1.bf16.msra.mxu0 %v86
  %109 = vmatprep.subr.bf16.mxu0 0
  %110 = vmatpush1.bf16.msra.mxu0 %v87
  %111 = vmatprep.subr.bf16.mxu0 0
  %112 = vmatpush1.bf16.msra.mxu0 %v88
  %113 = vmatprep.subr.bf16.mxu0 0
  %114 = vmatpush1.bf16.msra.mxu0 0
  %115 = vmatprep.subr.bf16.mxu0 0
  %116 = vmatpush1.bf16.msra.mxu0 0
  %117 = vmatprep.subr.bf16.mxu0 0
  %118 = vmatpush1.bf16.msra.mxu0 0
  %119 = vmatprep.subr.bf16.mxu0 0
  %120 = vmatpush1.bf16.msra.mxu0 0
  %121 = vmatprep.subr.bf16.mxu0 0
  %122 = vmatpush1.bf16.msra.mxu0 0
  %123 = vmatprep.subr.bf16.mxu0 0
  %124 = vmatpush1.bf16.msra.mxu0 0
  %125 = vmatprep.subr.bf16.mxu0 0
  %126 = vmatpush1.bf16.msra.mxu0 0
  %127 = vmatprep.subr.bf16.mxu0 0
  %128 = vmatpush1.bf16.msra.mxu0 0
  %129 = vmatprep.mubr.bf16.mxu0 0
  %130 = vmatmul.mubr.bf16.gmra.mrb[0].mxu0 %v25
  %v131 = vpop.f32.mrb[0].mxu0
  %v132 = vadd.f32 0.0, %v131
  %v133 = vpop.f32.mrb[0].mxu0
  %v134 = vpop.f32.mrb[0].mxu0
  %v135 = vadd.f32 0.0, %v134
  %v136 = vpop.f32.mrb[0].mxu0
  %137 = vmatprep.mubr.bf16.mxu0 0
  %138 = vmatmul.mubr.bf16.gmra.mrb[0].mxu0 %v26
  %v139 = vpop.f32.mrb[0].mxu0
  %v140 = vadd.f32 0.0, %v139
  %v141 = vpop.f32.mrb[0].mxu0
  %v142 = vpop.f32.mrb[0].mxu0
  %v143 = vadd.f32 0.0, %v142
  %v144 = vpop.f32.mrb[0].mxu0
  %145 = vmatprep.mubr.bf16.mxu0 0
  %146 = vmatmul.mubr.bf16.gmra.mrb[0].mxu0 %v27
  %v147 = vpop.f32.mrb[0].mxu0
  %v148 = vadd.f32 0.0, %v147
  %v149 = vpop.f32.mrb[0].mxu0
  %v150 = vpop.f32.mrb[0].mxu0
  %v151 = vadd.f32 0.0, %v150
  %v152 = vpop.f32.mrb[0].mxu0
  %153 = vmatprep.mubr.bf16.mxu0 0
  %154 = vmatmul.mubr.bf16.gmra.mrb[0].mxu0 %v28
  %v155 = vpop.f32.mrb[0].mxu0
  %v156 = vadd.f32 0.0, %v155
  %v157 = vpop.f32.mrb[0].mxu0
  %v158 = vpop.f32.mrb[0].mxu0
  %v159 = vadd.f32 0.0, %v158
  %v160 = vpop.f32.mrb[0].mxu0
  %161 = vmatprep.mubr.bf16.mxu0 0
  %162 = vmatmul.mubr.bf16.gmra.mrb[0].mxu0 %v29
  %v163 = vpop.f32.mrb[0].mxu0
  %v164 = vadd.f32 0.0, %v163
  %v165 = vpop.f32.mrb[0].mxu0
  %v166 = vpop.f32.mrb[0].mxu0
  %v167 = vadd.f32 0.0, %v166
  %v168 = vpop.f32.mrb[0].mxu0
  %169 = vmatprep.mubr.bf16.mxu0 0
  %170 = vmatmul.mubr.bf16.gmra.mrb[0].mxu0 %v30
  %v171 = vpop.f32.mrb[0].mxu0
  %v172 = vadd.f32 0.0, %v171
  %v173 = vpop.f32.mrb[0].mxu0
  %v174 = vpop.f32.mrb[0].mxu0
  %v175 = vadd.f32 0.0, %v174
  %v176 = vpop.f32.mrb[0].mxu0
  %177 = vmatprep.mubr.bf16.mxu0 0
  %178 = vmatmul.mubr.bf16.gmra.mrb[0].mxu0 %v31
  %v179 = vpop.f32.mrb[0].mxu0
  %v180 = vadd.f32 0.0, %v179
  %v181 = vpop.f32.mrb[0].mxu0
  %v182 = vpop.f32.mrb[0].mxu0
  %v183 = vadd.f32 0.0, %v182
  %v184 = vpop.f32.mrb[0].mxu0
  %185 = vmatprep.mubr.bf16.mxu0 0
  %186 = vmatmul.mubr.bf16.gmra.mrb[0].mxu0 %v32
  %v187 = vpop.f32.mrb[0].mxu0
  %v188 = vadd.f32 0.0, %v187
  %v189 = vpop.f32.mrb[0].mxu0
  %v190 = vpop.f32.mrb[0].mxu0
  %v191 = vadd.f32 0.0, %v190
  %v192 = vpop.f32.mrb[0].mxu0
  %193 = vdwg.mxu0
  %v194 = vld [vmem:[%s2] sm:$0xff]
  %v195 = vld [vmem:[%s2 + $0x8] sm:$0xff]
  %v196 = vld [vmem:[%s2 + $0x10] sm:$0xff]
  %v197 = vld [vmem:[%s2 + $0x18] sm:$0xff]
  %v198 = vld [vmem:[%s2 + $0x20] sm:$0xff]
  %v199 = vld [vmem:[%s2 + $0x28] sm:$0xff]
  %v200 = vld [vmem:[%s2 + $0x30] sm:$0xff]
  %v201 = vld [vmem:[%s2 + $0x38] sm:$0xff]
  %v202 = vld [vmem:[%s2 + $0x40] sm:$0xff]
  %v203 = vld [vmem:[%s2 + $0x48] sm:$0xff]
  %v204 = vld [vmem:[%s2 + $0x50] sm:$0xff]
  %v205 = vld [vmem:[%s2 + $0x58] sm:$0xff]
  %v206 = vld [vmem:[%s2 + $0x60] sm:$0xff]
  %v207 = vld [vmem:[%s2 + $0x68] sm:$0xff]
  %v208 = vld [vmem:[%s2 + $0x70] sm:$0xff]
  %v209 = vld [vmem:[%s2 + $0x78] sm:$0xff]
  %v210 = vld [vmem:[%s3] sm:$0xff]
  %v211 = vld [vmem:[%s3 + $0x8] sm:$0xff]
  %v212 = vld [vmem:[%s3 + $0x10] sm:$0xff]
  %v213 = vld [vmem:[%s3 + $0x18] sm:$0xff]
  %v214 = vld [vmem:[%s3 + $0x20] sm:$0xff]
  %v215 = vld [vmem:[%s3 + $0x28] sm:$0xff]
  %v216 = vld [vmem:[%s3 + $0x30] sm:$0xff]
  %v217 = vld [vmem:[%s3 + $0x38] sm:$0xff]
  %v218 = vld [vmem:[%s3 + $0x40] sm:$0xff]
  %v219 = vld [vmem:[%s3 + $0x48] sm:$0xff]
  %v220 = vld [vmem:[%s3 + $0x50] sm:$0xff]
  %v221 = vld [vmem:[%s3 + $0x58] sm:$0xff]
  %v222 = vld [vmem:[%s3 + $0x60] sm:$0xff]
  %v223 = vld [vmem:[%s3 + $0x68] sm:$0xff]
  %v224 = vld [vmem:[%s3 + $0x70] sm:$0xff]
  %v225 = vld [vmem:[%s3 + $0x78] sm:$0xff]
  %v226 = vld [vmem:[%s4] sm:$0x1]
  %227 = vmatprep.subr.mxu0 0.0
  %228 = vmatpush1.msra.mxu0 %v210
  %229 = vmatprep.subr.mxu0 0.0
  %230 = vmatpush1.msra.mxu0 %v211
  %231 = vmatprep.subr.mxu0 0.0
  %232 = vmatpush1.msra.mxu0 %v212
  %233 = vmatprep.subr.mxu0 0.0
  %234 = vmatpush1.msra.mxu0 %v213
  %235 = vmatprep.subr.mxu0 0.0
  %236 = vmatpush1.msra.mxu0 %v214
  %237 = vmatprep.subr.mxu0 0.0
  %238 = vmatpush1.msra.mxu0 %v215
  %239 = vmatprep.subr.mxu0 0.0
  %240 = vmatpush1.msra.mxu0 %v216
  %241 = vmatprep.subr.mxu0 0.0
  %242 = vmatpush1.msra.mxu0 %v217
  %243 = vmatprep.subr.mxu0 0.0
  %244 = vmatpush1.msra.mxu0 %v218
  %245 = vmatprep.subr.mxu0 0.0
  %246 = vmatpush1.msra.mxu0 %v219
  %247 = vmatprep.subr.mxu0 0.0
  %248 = vmatpush1.msra.mxu0 %v220
  %249 = vmatprep.subr.mxu0 0.0
  %250 = vmatpush1.msra.mxu0 %v221
  %251 = vmatprep.subr.mxu0 0.0
  %252 = vmatpush1.msra.mxu0 %v222
  %253 = vmatprep.subr.mxu0 0.0
  %254 = vmatpush1.msra.mxu0 %v223
  %255 = vmatprep.subr.mxu0 0.0
  %256 = vmatpush1.msra.mxu0 %v224
  %257 = vmatprep.subr.mxu0 0.0
  %258 = vmatpush1.msra.mxu0 %v225
  %259 = vmatprep.subr.mxu0 0.0
  %260 = vmatpush1.msra.mxu0 0.0
  %261 = vmatprep.subr.mxu0 0.0
  %262 = vmatpush1.msra.mxu0 0.0
  %263 = vmatprep.subr.mxu0 0.0
  %264 = vmatpush1.msra.mxu0 0.0
  %265 = vmatprep.subr.mxu0 0.0
  %266 = vmatpush1.msra.mxu0 0.0
  %267 = vmatprep.subr.mxu0 0.0
  %268 = vmatpush1.msra.mxu0 0.0
  %269 = vmatprep.subr.mxu0 0.0
  %270 = vmatpush1.msra.mxu0 0.0
  %271 = vmatprep.subr.mxu0 0.0
  %272 = vmatpush1.msra.mxu0 0.0
  %273 = vmatprep.subr.mxu0 0.0
  %274 = vmatpush1.msra.mxu0 0.0
  %275 = vmatprep.subr.mxu0 0.0
  %276 = vmatpush1.msra.mxu0 0.0
  %277 = vmatprep.subr.mxu0 0.0
  %278 = vmatpush1.msra.mxu0 0.0
  %279 = vmatprep.subr.mxu0 0.0
  %280 = vmatpush1.msra.mxu0 0.0
  %281 = vmatprep.subr.mxu0 0.0
  %282 = vmatpush1.msra.mxu0 0.0
  %283 = vmatprep.subr.mxu0 0.0
  %284 = vmatpush1.msra.mxu0 0.0
  %285 = vmatprep.subr.mxu0 0.0
  %286 = vmatpush1.msra.mxu0 0.0
  %287 = vmatprep.subr.mxu0 0.0
  %288 = vmatpush1.msra.mxu0 0.0
  %289 = vmatprep.subr.mxu0 0.0
  %290 = vmatpush1.msra.mxu0 0.0
  %291 = vmatprep.mubr.f32.mxu0 0.0
  %292 = vmatmul.mubr.f32.gmra.mrb[0].mxu0 %v132
  %v293 = vpop.f32.mrb[0].mxu0
  %v294 = vadd.f32 0.0, %v293
  %v295 = vpop.f32.mrb[0].mxu0
  %296 = vmatprep.mubr.f32.mxu0 0.0
  %297 = vmatmul.mubr.f32.gmra.mrb[0].mxu0 %v135
  %v298 = vpop.f32.mrb[0].mxu0
  %v299 = vadd.f32 0.0, %v298
  %v300 = vpop.f32.mrb[0].mxu0
  %301 = vmatprep.mubr.f32.mxu0 0.0
  %302 = vmatmul.mubr.f32.gmra.mrb[0].mxu0 %v140
  %v303 = vpop.f32.mrb[0].mxu0
  %v304 = vadd.f32 0.0, %v303
  %v305 = vpop.f32.mrb[0].mxu0
  %306 = vmatprep.mubr.f32.mxu0 0.0
  %307 = vmatmul.mubr.f32.gmra.mrb[0].mxu0 %v143
  %v308 = vpop.f32.mrb[0].mxu0
  %v309 = vadd.f32 0.0, %v308
  %v310 = vpop.f32.mrb[0].mxu0
  %311 = vmatprep.mubr.f32.mxu0 0.0
  %312 = vmatmul.mubr.f32.gmra.mrb[0].mxu0 %v148
  %v313 = vpop.f32.mrb[0].mxu0
  %v314 = vadd.f32 0.0, %v313
  %v315 = vpop.f32.mrb[0].mxu0
  %316 = vmatprep.mubr.f32.mxu0 0.0
  %317 = vmatmul.mubr.f32.gmra.mrb[0].mxu0 %v151
  %v318 = vpop.f32.mrb[0].mxu0
  %v319 = vadd.f32 0.0, %v318
  %v320 = vpop.f32.mrb[0].mxu0
  %321 = vmatprep.mubr.f32.mxu0 0.0
  %322 = vmatmul.mubr.f32.gmra.mrb[0].mxu0 %v156
  %v323 = vpop.f32.mrb[0].mxu0
  %v324 = vadd.f32 0.0, %v323
  %v325 = vpop.f32.mrb[0].mxu0
  %326 = vmatprep.mubr.f32.mxu0 0.0
  %327 = vmatmul.mubr.f32.gmra.mrb[0].mxu0 %v159
  %v328 = vpop.f32.mrb[0].mxu0
  %v329 = vadd.f32 0.0, %v328
  %v330 = vpop.f32.mrb[0].mxu0
  %331 = vmatprep.mubr.f32.mxu0 0.0
  %332 = vmatmul.mubr.f32.gmra.mrb[0].mxu0 %v164
  %v333 = vpop.f32.mrb[0].mxu0
  %v334 = vadd.f32 0.0, %v333
  %v335 = vpop.f32.mrb[0].mxu0
  %336 = vmatprep.mubr.f32.mxu0 0.0
  %337 = vmatmul.mubr.f32.gmra.mrb[0].mxu0 %v167
  %v338 = vpop.f32.mrb[0].mxu0
  %v339 = vadd.f32 0.0, %v338
  %v340 = vpop.f32.mrb[0].mxu0
  %341 = vmatprep.mubr.f32.mxu0 0.0
  %342 = vmatmul.mubr.f32.gmra.mrb[0].mxu0 %v172
  %v343 = vpop.f32.mrb[0].mxu0
  %v344 = vadd.f32 0.0, %v343
  %v345 = vpop.f32.mrb[0].mxu0
  %346 = vmatprep.mubr.f32.mxu0 0.0
  %347 = vmatmul.mubr.f32.gmra.mrb[0].mxu0 %v175
  %v348 = vpop.f32.mrb[0].mxu0
  %v349 = vadd.f32 0.0, %v348
  %v350 = vpop.f32.mrb[0].mxu0
  %351 = vmatprep.mubr.f32.mxu0 0.0
  %352 = vmatmul.mubr.f32.gmra.mrb[0].mxu0 %v180
  %v353 = vpop.f32.mrb[0].mxu0
  %v354 = vadd.f32 0.0, %v353
  %v355 = vpop.f32.mrb[0].mxu0
  %356 = vmatprep.mubr.f32.mxu0 0.0
  %357 = vmatmul.mubr.f32.gmra.mrb[0].mxu0 %v183
  %v358 = vpop.f32.mrb[0].mxu0
  %v359 = vadd.f32 0.0, %v358
  %v360 = vpop.f32.mrb[0].mxu0
  %361 = vmatprep.mubr.f32.mxu0 0.0
  %362 = vmatmul.mubr.f32.gmra.mrb[0].mxu0 %v188
  %v363 = vpop.f32.mrb[0].mxu0
  %v364 = vadd.f32 0.0, %v363
  %v365 = vpop.f32.mrb[0].mxu0
  %366 = vmatprep.mubr.f32.mxu0 0.0
  %367 = vmatmul.mubr.f32.gmra.mrb[0].mxu0 %v191
  %v368 = vpop.f32.mrb[0].mxu0
  %v369 = vadd.f32 0.0, %v368
  %v370 = vpop.f32.mrb[0].mxu0
  %371 = vdwg.mxu0
  %373 = vset.pattern.permute.xlu0 0
  %374 = vperm.xlu0 %373, %v194
  %v375 = vpop.permute.xlu0 %374
  %378 = vset.pattern.permute.xlu0 0
  %379 = vperm.xlu0 %378, %v195
  %v380 = vpop.permute.xlu0 %379
  %383 = vset.pattern.permute.xlu0 0
  %384 = vperm.xlu0 %383, %v196
  %v385 = vpop.permute.xlu0 %384
  %388 = vset.pattern.permute.xlu0 0
  %389 = vperm.xlu0 %388, %v197
  %v390 = vpop.permute.xlu0 %389
  %393 = vset.pattern.permute.xlu0 0
  %394 = vperm.xlu0 %393, %v198
  %v395 = vpop.permute.xlu0 %394
  %398 = vset.pattern.permute.xlu0 0
  %399 = vperm.xlu0 %398, %v199
  %v400 = vpop.permute.xlu0 %399
  %403 = vset.pattern.permute.xlu0 0
  %404 = vperm.xlu0 %403, %v200
  %v405 = vpop.permute.xlu0 %404
  %408 = vset.pattern.permute.xlu0 0
  %409 = vperm.xlu0 %408, %v201
  %v410 = vpop.permute.xlu0 %409
  %413 = vset.pattern.permute.xlu0 0
  %414 = vperm.xlu0 %413, %v202
  %v415 = vpop.permute.xlu0 %414
  %418 = vset.pattern.permute.xlu0 0
  %419 = vperm.xlu0 %418, %v203
  %v420 = vpop.permute.xlu0 %419
  %423 = vset.pattern.permute.xlu0 0
  %424 = vperm.xlu0 %423, %v204
  %v425 = vpop.permute.xlu0 %424
  %428 = vset.pattern.permute.xlu0 0
  %429 = vperm.xlu0 %428, %v205
  %v430 = vpop.permute.xlu0 %429
  %433 = vset.pattern.permute.xlu0 0
  %434 = vperm.xlu0 %433, %v206
  %v435 = vpop.permute.xlu0 %434
  %438 = vset.pattern.permute.xlu0 0
  %439 = vperm.xlu0 %438, %v207
  %v440 = vpop.permute.xlu0 %439
  %443 = vset.pattern.permute.xlu0 0
  %444 = vperm.xlu0 %443, %v208
  %v445 = vpop.permute.xlu0 %444
  %448 = vset.pattern.permute.xlu0 0
  %449 = vperm.xlu0 %448, %v209
  %v450 = vpop.permute.xlu0 %449
  %v452 = vmul.f32 %v294, %v375
  %v453 = vmul.f32 %v299, %v380
  %v454 = vmul.f32 %v304, %v385
  %v455 = vmul.f32 %v309, %v390
  %v456 = vmul.f32 %v314, %v395
  %v457 = vmul.f32 %v319, %v400
  %v458 = vmul.f32 %v324, %v405
  %v459 = vmul.f32 %v329, %v410
  %v460 = vmul.f32 %v334, %v415
  %v461 = vmul.f32 %v339, %v420
  %v462 = vmul.f32 %v344, %v425
  %v463 = vmul.f32 %v349, %v430
  %v464 = vmul.f32 %v354, %v435
  %v465 = vmul.f32 %v359, %v440
  %v466 = vmul.f32 %v364, %v445
  %v467 = vmul.f32 %v369, %v450
  %v469 = vlaneseq
  %v470 = vshrl.u32 %v469, 7
  %v471 = vsub.s32 0, %v470
  %v472 = vrot.slane %v226, %v471
  %v474 = vadd.f32 %v452, %v472
  %v475 = vadd.f32 %v453, %v472
  %v476 = vadd.f32 %v454, %v472
  %v477 = vadd.f32 %v455, %v472
  %v478 = vadd.f32 %v456, %v472
  %v479 = vadd.f32 %v457, %v472
  %v480 = vadd.f32 %v458, %v472
  %v481 = vadd.f32 %v459, %v472
  %v482 = vadd.f32 %v460, %v472
  %v483 = vadd.f32 %v461, %v472
  %v484 = vadd.f32 %v462, %v472
  %v485 = vadd.f32 %v463, %v472
  %v486 = vadd.f32 %v464, %v472
  %v487 = vadd.f32 %v465, %v472
  %v488 = vadd.f32 %v466, %v472
  %v489 = vadd.f32 %v467, %v472
  %v490 = vlaneseq
  %v491 = vand.u32 %v490, 127
  %vm492 = vcmp.lt.s32.totalorder %v491, 8
  %v493 = vsel %vm492, %v474, -inf
  %v494 = vsel %vm492, %v475, -inf
  %v495 = vsel %vm492, %v476, -inf
  %v496 = vsel %vm492, %v477, -inf
  %v497 = vsel %vm492, %v478, -inf
  %v498 = vsel %vm492, %v479, -inf
  %v499 = vsel %vm492, %v480, -inf
  %v500 = vsel %vm492, %v481, -inf
  %v501 = vsel %vm492, %v482, -inf
  %v502 = vsel %vm492, %v483, -inf
  %v503 = vsel %vm492, %v484, -inf
  %v504 = vsel %vm492, %v485, -inf
  %v505 = vsel %vm492, %v486, -inf
  %v506 = vsel %vm492, %v487, -inf
  %v507 = vsel %vm492, %v488, -inf
  %v508 = vsel %vm492, %v489, -inf
  %509 = vmax.xlane.f32.xlu0 %v493
  %v510 = vpop.xlane.xlu0 %509
  %511 = vmax.xlane.f32.xlu0 %v494
  %v512 = vpop.xlane.xlu0 %511
  %513 = vmax.xlane.f32.xlu0 %v495
  %v514 = vpop.xlane.xlu0 %513
  %515 = vmax.xlane.f32.xlu0 %v496
  %v516 = vpop.xlane.xlu0 %515
  %517 = vmax.xlane.f32.xlu0 %v497
  %v518 = vpop.xlane.xlu0 %517
  %519 = vmax.xlane.f32.xlu0 %v498
  %v520 = vpop.xlane.xlu0 %519
  %521 = vmax.xlane.f32.xlu0 %v499
  %v522 = vpop.xlane.xlu0 %521
  %523 = vmax.xlane.f32.xlu0 %v500
  %v524 = vpop.xlane.xlu0 %523
  %525 = vmax.xlane.f32.xlu0 %v501
  %v526 = vpop.xlane.xlu0 %525
  %527 = vmax.xlane.f32.xlu0 %v502
  %v528 = vpop.xlane.xlu0 %527
  %529 = vmax.xlane.f32.xlu0 %v503
  %v530 = vpop.xlane.xlu0 %529
  %531 = vmax.xlane.f32.xlu0 %v504
  %v532 = vpop.xlane.xlu0 %531
  %533 = vmax.xlane.f32.xlu0 %v505
  %v534 = vpop.xlane.xlu0 %533
  %535 = vmax.xlane.f32.xlu0 %v506
  %v536 = vpop.xlane.xlu0 %535
  %537 = vmax.xlane.f32.xlu0 %v507
  %v538 = vpop.xlane.xlu0 %537
  %539 = vmax.xlane.f32.xlu0 %v508
  %v540 = vpop.xlane.xlu0 %539
  %v541 = vsub.f32 %v474, %v510
  %v542 = vsub.f32 %v475, %v512
  %v543 = vsub.f32 %v476, %v514
  %v544 = vsub.f32 %v477, %v516
  %v545 = vsub.f32 %v478, %v518
  %v546 = vsub.f32 %v479, %v520
  %v547 = vsub.f32 %v480, %v522
  %v548 = vsub.f32 %v481, %v524
  %v549 = vsub.f32 %v482, %v526
  %v550 = vsub.f32 %v483, %v528
  %v551 = vsub.f32 %v484, %v530
  %v552 = vsub.f32 %v485, %v532
  %v553 = vsub.f32 %v486, %v534
  %v554 = vsub.f32 %v487, %v536
  %v555 = vsub.f32 %v488, %v538
  %v556 = vsub.f32 %v489, %v540
  %v557 = vmul.f32 %v541, 1.442695
  %v558 = vpow.pop %v557
  %v559 = vmul.f32 %v542, 1.442695
  %v560 = vpow.pop %v559
  %v561 = vmul.f32 %v543, 1.442695
  %v562 = vpow.pop %v561
  %v563 = vmul.f32 %v544, 1.442695
  %v564 = vpow.pop %v563
  %v565 = vmul.f32 %v545, 1.442695
  %v566 = vpow.pop %v565
  %v567 = vmul.f32 %v546, 1.442695
  %v568 = vpow.pop %v567
  %v569 = vmul.f32 %v547, 1.442695
  %v570 = vpow.pop %v569
  %v571 = vmul.f32 %v548, 1.442695
  %v572 = vpow.pop %v571
  %v573 = vmul.f32 %v549, 1.442695
  %v574 = vpow.pop %v573
  %v575 = vmul.f32 %v550, 1.442695
  %v576 = vpow.pop %v575
  %v577 = vmul.f32 %v551, 1.442695
  %v578 = vpow.pop %v577
  %v579 = vmul.f32 %v552, 1.442695
  %v580 = vpow.pop %v579
  %v581 = vmul.f32 %v553, 1.442695
  %v582 = vpow.pop %v581
  %v583 = vmul.f32 %v554, 1.442695
  %v584 = vpow.pop %v583
  %v585 = vmul.f32 %v555, 1.442695
  %v586 = vpow.pop %v585
  %v587 = vmul.f32 %v556, 1.442695
  %v588 = vpow.pop %v587
  %v589 = vsel %vm492, %v558, 0.0
  %v590 = vsel %vm492, %v560, 0.0
  %v591 = vsel %vm492, %v562, 0.0
  %v592 = vsel %vm492, %v564, 0.0
  %v593 = vsel %vm492, %v566, 0.0
  %v594 = vsel %vm492, %v568, 0.0
  %v595 = vsel %vm492, %v570, 0.0
  %v596 = vsel %vm492, %v572, 0.0
  %v597 = vsel %vm492, %v574, 0.0
  %v598 = vsel %vm492, %v576, 0.0
  %v599 = vsel %vm492, %v578, 0.0
  %v600 = vsel %vm492, %v580, 0.0
  %v601 = vsel %vm492, %v582, 0.0
  %v602 = vsel %vm492, %v584, 0.0
  %v603 = vsel %vm492, %v586, 0.0
  %v604 = vsel %vm492, %v588, 0.0
  %605 = vadd.xlane.f32.xlu0 %v589
  %v606 = vpop.xlane.xlu0 %605
  %607 = vadd.xlane.f32.xlu0 %v590
  %v608 = vpop.xlane.xlu0 %607
  %609 = vadd.xlane.f32.xlu0 %v591
  %v610 = vpop.xlane.xlu0 %609
  %611 = vadd.xlane.f32.xlu0 %v592
  %v612 = vpop.xlane.xlu0 %611
  %613 = vadd.xlane.f32.xlu0 %v593
  %v614 = vpop.xlane.xlu0 %613
  %615 = vadd.xlane.f32.xlu0 %v594
  %v616 = vpop.xlane.xlu0 %615
  %617 = vadd.xlane.f32.xlu0 %v595
  %v618 = vpop.xlane.xlu0 %617
  %619 = vadd.xlane.f32.xlu0 %v596
  %v620 = vpop.xlane.xlu0 %619
  %621 = vadd.xlane.f32.xlu0 %v597
  %v622 = vpop.xlane.xlu0 %621
  %623 = vadd.xlane.f32.xlu0 %v598
  %v624 = vpop.xlane.xlu0 %623
  %625 = vadd.xlane.f32.xlu0 %v599
  %v626 = vpop.xlane.xlu0 %625
  %627 = vadd.xlane.f32.xlu0 %v600
  %v628 = vpop.xlane.xlu0 %627
  %629 = vadd.xlane.f32.xlu0 %v601
  %v630 = vpop.xlane.xlu0 %629
  %631 = vadd.xlane.f32.xlu0 %v602
  %v632 = vpop.xlane.xlu0 %631
  %633 = vadd.xlane.f32.xlu0 %v603
  %v634 = vpop.xlane.xlu0 %633
  %635 = vadd.xlane.f32.xlu0 %v604
  %v636 = vpop.xlane.xlu0 %635
  %v637 = vlog2.pop %v606
  %v638 = vmul.f32 %v637, 0.6931472
  %v639 = vlog2.pop %v608
  %v640 = vmul.f32 %v639, 0.6931472
  %v641 = vlog2.pop %v610
  %v642 = vmul.f32 %v641, 0.6931472
  %v643 = vlog2.pop %v612
  %v644 = vmul.f32 %v643, 0.6931472
  %v645 = vlog2.pop %v614
  %v646 = vmul.f32 %v645, 0.6931472
  %v647 = vlog2.pop %v616
  %v648 = vmul.f32 %v647, 0.6931472
  %v649 = vlog2.pop %v618
  %v650 = vmul.f32 %v649, 0.6931472
  %v651 = vlog2.pop %v620
  %v652 = vmul.f32 %v651, 0.6931472
  %v653 = vlog2.pop %v622
  %v654 = vmul.f32 %v653, 0.6931472
  %v655 = vlog2.pop %v624
  %v656 = vmul.f32 %v655, 0.6931472
  %v657 = vlog2.pop %v626
  %v658 = vmul.f32 %v657, 0.6931472
  %v659 = vlog2.pop %v628
  %v660 = vmul.f32 %v659, 0.6931472
  %v661 = vlog2.pop %v630
  %v662 = vmul.f32 %v661, 0.6931472
  %v663 = vlog2.pop %v632
  %v664 = vmul.f32 %v663, 0.6931472
  %v665 = vlog2.pop %v634
  %v666 = vmul.f32 %v665, 0.6931472
  %v667 = vlog2.pop %v636
  %v668 = vmul.f32 %v667, 0.6931472
  %v669 = vadd.f32 %v510, %v638
  %v670 = vadd.f32 %v512, %v640
  %v671 = vadd.f32 %v514, %v642
  %v672 = vadd.f32 %v516, %v644
  %v673 = vadd.f32 %v518, %v646
  %v674 = vadd.f32 %v520, %v648
  %v675 = vadd.f32 %v522, %v650
  %v676 = vadd.f32 %v524, %v652
  %v677 = vadd.f32 %v526, %v654
  %v678 = vadd.f32 %v528, %v656
  %v679 = vadd.f32 %v530, %v658
  %v680 = vadd.f32 %v532, %v660
  %v681 = vadd.f32 %v534, %v662
  %v682 = vadd.f32 %v536, %v664
  %v683 = vadd.f32 %v538, %v666
  %v684 = vadd.f32 %v540, %v668
  %v685 = vsub.f32 %v474, %v669
  %v686 = vsub.f32 %v475, %v670
  %v687 = vsub.f32 %v476, %v671
  %v688 = vsub.f32 %v477, %v672
  %v689 = vsub.f32 %v478, %v673
  %v690 = vsub.f32 %v479, %v674
  %v691 = vsub.f32 %v480, %v675
  %v692 = vsub.f32 %v481, %v676
  %v693 = vsub.f32 %v482, %v677
  %v694 = vsub.f32 %v483, %v678
  %v695 = vsub.f32 %v484, %v679
  %v696 = vsub.f32 %v485, %v680
  %v697 = vsub.f32 %v486, %v681
  %v698 = vsub.f32 %v487, %v682
  %v699 = vsub.f32 %v488, %v683
  %v700 = vsub.f32 %v489, %v684
  %701 = vst [vmem:[%s5] sm:$0xff] %v685
  %702 = vst [vmem:[%s5 + $0x8] sm:$0xff] %v686
  %703 = vst [vmem:[%s5 + $0x10] sm:$0xff] %v687
  %704 = vst [vmem:[%s5 + $0x18] sm:$0xff] %v688
  %705 = vst [vmem:[%s5 + $0x20] sm:$0xff] %v689
  %706 = vst [vmem:[%s5 + $0x28] sm:$0xff] %v690
  %707 = vst [vmem:[%s5 + $0x30] sm:$0xff] %v691
  %708 = vst [vmem:[%s5 + $0x38] sm:$0xff] %v692
  %709 = vst [vmem:[%s5 + $0x40] sm:$0xff] %v693
  %710 = vst [vmem:[%s5 + $0x48] sm:$0xff] %v694
  %711 = vst [vmem:[%s5 + $0x50] sm:$0xff] %v695
  %712 = vst [vmem:[%s5 + $0x58] sm:$0xff] %v696
  %713 = vst [vmem:[%s5 + $0x60] sm:$0xff] %v697
  %714 = vst [vmem:[%s5 + $0x68] sm:$0xff] %v698
  %715 = vst [vmem:[%s5 + $0x70] sm:$0xff] %v699
  %716 = vst [vmem:[%s5 + $0x78] sm:$0xff] %v700
  // Predicated region
  $region22: #{gcn_model_forward.5} parent=0 // pred_check
    _
  $region23: #{gcn_model_forward.5} parent=0 // pred_check_branch
    %718 = sbr.rel (0) target = $region25
  $region24: #{gcn_model_forward.5} parent=0 // pred_region
    _
  $region25: #{gcn_model_forward.5} parent=0 // pred_fallthru
    _
  // Predicated region
  $region26: #{gcn_model_forward.5} parent=0 // pred_check
    _
  $region27: #{gcn_model_forward.5} parent=0 // pred_check_branch
    %720 = sbr.rel (0) target = $region29
  $region28: #{gcn_model_forward.5} parent=0 // pred_region
    _
  $region29: #{gcn_model_forward.5} parent=0 // pred_fallthru
    _

</llo_original>
